<compile_context>
chip_gen: v7x
topology: tpu7x:2x2x1
jax: 0.10.0
libtpu: 0.0.40
codegen_flags: <defaults>
</compile_context>

<pallas_src>
import functools

import jax
import jax.numpy as jnp
from jax.experimental import pallas as pl
from jax.experimental.pallas import tpu as pltpu

LN_EPS = 1e-5


def _layernorm(x, gamma, beta):
    # Two-pass form (mean, then centered variance): numerically safe for
    # non-zero-mean activations; matches the PyTorch LayerNorm reference.
    mu = jnp.mean(x, axis=-1, keepdims=True)
    xc = x - mu
    var = jnp.mean(xc * xc, axis=-1, keepdims=True)
    return xc * jax.lax.rsqrt(var + LN_EPS) * gamma + beta


def _gelu_exact(x):
    # erf-based GELU, matches nn.GELU() default.
    return 0.5 * x * (1.0 + jax.lax.erf(x * 0.7071067811865476))


def block_kernel(x_ref, g1_ref, be1_ref,
                 w1u_ref, b1u_ref, w1v_ref, b1v_ref,
                 gg_ref, bg_ref, wp_ref, bp_ref,
                 w2_ref, b2_ref, o_ref, gated_ref, *, tb, seq_len):
    # x block: (TB*N, D) rows covering TB whole batch elements.
    x = x_ref[...].astype(jnp.float32)

    # --- LayerNorm over channel dim (f32) ---
    xn = _layernorm(x, g1_ref[0], be1_ref[0])
    xn_b = xn.astype(jnp.bfloat16)

    # --- fc1 split into u / v halves: (TB*N, D) @ (D, G) -> (TB*N, G) ---
    # (When G % 128 == 0 in production, a single fused (D, 2G) matmul plus a
    #  lane-aligned free-view split streams xn through the MXU once instead
    #  of twice; kept split here because demo G=64 is not lane-aligned.)
    u = jnp.dot(xn_b, w1u_ref[...], preferred_element_type=jnp.float32) + b1u_ref[0]
    v = jnp.dot(xn_b, w1v_ref[...], preferred_element_type=jnp.float32) + b1v_ref[0]

    # --- exact GELU on both halves (act() precedes the SGU chunk) ---
    u = _gelu_exact(u)
    v = _gelu_exact(v)

    # --- SpatialGatingUnit ---
    vn = _layernorm(v, gg_ref[0], bg_ref[0])          # f32; sliced in f32 (8-row tiles)
    wp = wp_ref[...]                                  # (N, N) bf16
    gate_dim = u.shape[1]
    # SGU proj bias: (N, 1) operand, lane-broadcast once (hoisted above the loop).
    bp = jnp.broadcast_to(bp_ref[...].astype(jnp.float32), (seq_len, gate_dim))

    # Per-batch seq-projection; results land directly in a VMEM scratch slab
    # (no concat materialization), then one large fc2 runs over the full slab.
    # Static unroll is fine for small tb; switch to lax.fori_loop(unroll=True)
    # if tb is raised to fill the MXU (bounds vreg live ranges).
    for t in range(tb):
        r0 = t * seq_len                                   # f32-tile-aligned (multiple of 8)
        vt = vn[r0:r0 + seq_len, :].astype(jnp.bfloat16)   # slice f32, cast per slice
        zt = jnp.dot(wp, vt, preferred_element_type=jnp.float32) + bp
        gated_ref[r0:r0 + seq_len, :] = (u[r0:r0 + seq_len, :] * zt).astype(gated_ref.dtype)

    # --- fc2: (TB*N, G) @ (G, D) + b2 -> (TB*N, D) ---
    out = jnp.dot(gated_ref[...].astype(jnp.bfloat16), w2_ref[...],
                  preferred_element_type=jnp.float32) + b2_ref[0]

    # Note: for D < 128 (demo D=32) the store is lane-masked; pad D to 128 at
    # production widths for lane-dense stores (D=1024 already is).
    o_ref[...] = out.astype(o_ref.dtype)


@functools.partial(jax.jit, static_argnames=("tb",))
def gmlp_block(x, g1, be1, w1u, b1u, w1v, b1v, gg, bg, wp, bp, w2, b2, *, tb=2):
    B, N, D = x.shape
    G = w1u.shape[1]
    assert B % tb == 0, "batch must be divisible by the per-step batch tile"

    # Token-major 2-D view; each grid step covers TB whole batch elements.
    x2 = x.reshape(B * N, D)
    # SGU proj bias as an (N, 1) column; broadcast happens inside the kernel.
    bp_col = bp.reshape(N, 1).astype(jnp.float32)

    # bf16 gated scratch only when per-batch row offsets stay aligned to the
    # 16-row bf16 sublane packing; otherwise keep f32 (8-row tiles).
    gated_dtype = jnp.bfloat16 if N % 16 == 0 else jnp.float32

    const2 = lambda b: (0, 0)
    # Grid-constant operands: single-buffered (no 2x VMEM for weights).
    wspec = lambda shape: pl.BlockSpec(shape, const2, pipeline_mode=pl.Buffered(1))

    # Advisory cost estimate for XLA scheduling around the custom call.
    flops = 4 * B * N * D * G + 2 * B * N * N * G + 2 * B * N * G * D
    transcendentals = 2 * B * N * G
    inputs = (x2, g1, be1, w1u, b1u, w1v, b1v, gg, bg, wp, bp_col, w2, b2)
    bytes_accessed = (sum(a.size * a.dtype.itemsize for a in inputs)
                      + B * N * D * x.dtype.itemsize)

    # Explicit VMEM budget: single-buffered weights + double-buffered in/out
    # blocks + scratch + rough f32 activation-slab headroom, 2x margin,
    # clamped to [32 MiB, 64 MiB] (v5e default scoped limit is only 16 MiB;
    # v7x physical VMEM is 64 MiB per TensorCore).
    nbytes = lambda a: a.size * a.dtype.itemsize
    weight_bytes = sum(nbytes(a) for a in inputs[1:])
    io_bytes = 2 * 2 * (tb * N * D * x.dtype.itemsize)
    scratch_bytes = tb * N * G * jnp.dtype(gated_dtype).itemsize
    act_bytes = tb * N * (3 * D + 5 * G) * 4
    vmem_limit = int(min(64 << 20,
                         max(32 << 20,
                             2 * (weight_bytes + io_bytes + scratch_bytes + act_bytes))))

    out2 = pl.pallas_call(
        functools.partial(block_kernel, tb=tb, seq_len=N),
        out_shape=jax.ShapeDtypeStruct((B * N, D), x.dtype),
        grid_spec=pltpu.PrefetchScalarGridSpec(
            num_scalar_prefetch=0,
            grid=(B // tb,),
            in_specs=[
                pl.BlockSpec((tb * N, D), lambda b: (b, 0)),   # x rows
                wspec((1, D)),     # norm gamma
                wspec((1, D)),     # norm beta
                wspec((D, G)),     # fc1 weight, u half (bf16)
                wspec((1, G)),     # fc1 bias, u half
                wspec((D, G)),     # fc1 weight, v half (bf16)
                wspec((1, G)),     # fc1 bias, v half
                wspec((1, G)),     # sgu norm gamma
                wspec((1, G)),     # sgu norm beta
                wspec((N, N)),     # sgu proj weight (bf16)
                wspec((N, 1)),     # sgu proj bias column
                wspec((G, D)),     # fc2 weight (bf16)
                wspec((1, D)),     # fc2 bias
            ],
            out_specs=pl.BlockSpec((tb * N, D), lambda b: (b, 0)),
            scratch_shapes=[pltpu.VMEM((tb * N, G), gated_dtype)],
        ),
        compiler_params=pltpu.CompilerParams(
            dimension_semantics=("parallel",),
            vmem_limit_bytes=vmem_limit),
        cost_estimate=pl.CostEstimate(
            flops=flops,
            transcendentals=transcendentals,
            bytes_accessed=bytes_accessed),
    )(*inputs)

    return out2.reshape(B, N, D)


def reference(x, g1, be1, w1u, b1u, w1v, b1v, gg, bg, wp, bp, w2, b2):
    """Pure-JAX f32 forward pass of the PyTorch Block (ground truth)."""
    f32 = lambda a: a.astype(jnp.float32)

    def ln(t, g, b):
        mu = jnp.mean(t, axis=-1, keepdims=True)
        var = jnp.mean((t - mu) ** 2, axis=-1, keepdims=True)
        return (t - mu) / jnp.sqrt(var + LN_EPS) * g + b

    xn = ln(x, g1[0], be1[0])
    u = xn @ f32(w1u) + b1u[0]
    v = xn @ f32(w1v) + b1v[0]
    gelu = lambda t: 0.5 * t * (1.0 + jax.lax.erf(t / jnp.sqrt(2.0)))
    u, v = gelu(u), gelu(v)
    vn = ln(v, gg[0], bg[0])
    # Seq-axis projection per batch: z[b] = Wp @ vn[b] + bias[:, None]
    z = jnp.einsum('ij,bjg->big', f32(wp), vn) + bp[None, :, None]
    return (u * z) @ f32(w2) + b2[0]


if __name__ == "__main__":
    B, N, DIM, MLP_RATIO = 4, 8, 32, 4
    C = DIM * MLP_RATIO          # 128
    G = C // 2                   # 64
    TB = 2                       # batch elements per grid step

    key = jax.random.PRNGKey(0)
    keys = jax.random.split(key, 8)

    x = jax.random.normal(keys[0], (B, N, DIM), jnp.float32)

    # Block.norm (LayerNorm defaults)
    g1 = jnp.ones((1, DIM), jnp.float32)
    be1 = jnp.zeros((1, DIM), jnp.float32)
    # fc1: Linear(DIM, C); store transposed [DIM, C] split into u/v halves, bf16.
    w1 = (jax.random.normal(keys[1], (DIM, C), jnp.float32) * 0.05).astype(jnp.bfloat16)
    b1 = jax.random.normal(keys[2], (1, C), jnp.float32) * 0.05
    w1u, w1v = w1[:, :G], w1[:, G:]
    b1u, b1v = b1[:, :G], b1[:, G:]
    # sgu.norm
    gg = jnp.ones((1, G), jnp.float32)
    bg = jnp.zeros((1, G), jnp.float32)
    # sgu.proj: Linear(N, N); init_weights: weight ~ N(0, 1e-6), bias = 1.
    wp = (jax.random.normal(keys[3], (N, N), jnp.float32) * 1e-6).astype(jnp.bfloat16)
    bp = jnp.ones((N,), jnp.float32)
    # fc2: Linear(G, DIM); transposed [G, DIM], bf16.
    w2 = (jax.random.normal(keys[4], (G, DIM), jnp.float32) * 0.05).astype(jnp.bfloat16)
    b2 = jax.random.normal(keys[5], (1, DIM), jnp.float32) * 0.05

    out = gmlp_block(x, g1, be1, w1u, b1u, w1v, b1v, gg, bg, wp, bp, w2, b2, tb=TB)
    out = jax.block_until_ready(out)

    ref = reference(x, g1, be1, w1u, b1u, w1v, b1v, gg, bg, wp, bp, w2, b2)
    assert out.shape == (B, N, DIM)
    err = jnp.max(jnp.abs(out - ref))
    assert jnp.allclose(out, ref, atol=1e-2, rtol=1e-2), f"max abs err {err}"

    print("KERNEL_OK")
</pallas_src>

<mosaic_0001>
module attributes {stable_mosaic.version = 11 : i64} {
  func.func @block_kernel(%arg0: i32, %arg1: memref<16x32xf32, #tpu.memory_space<vmem>>, %arg2: memref<1x32xf32, #tpu.memory_space<vmem>>, %arg3: memref<1x32xf32, #tpu.memory_space<vmem>>, %arg4: memref<32x64xbf16, #tpu.memory_space<vmem>>, %arg5: memref<1x64xf32, #tpu.memory_space<vmem>>, %arg6: memref<32x64xbf16, #tpu.memory_space<vmem>>, %arg7: memref<1x64xf32, #tpu.memory_space<vmem>>, %arg8: memref<1x64xf32, #tpu.memory_space<vmem>>, %arg9: memref<1x64xf32, #tpu.memory_space<vmem>>, %arg10: memref<8x8xbf16, #tpu.memory_space<vmem>>, %arg11: memref<8x1xf32, #tpu.memory_space<vmem>>, %arg12: memref<64x32xbf16, #tpu.memory_space<vmem>>, %arg13: memref<1x32xf32, #tpu.memory_space<vmem>>, %arg14: memref<16x32xf32, #tpu.memory_space<vmem>>, %arg15: memref<16x64xf32, #tpu.memory_space<vmem>>) attributes {dimension_semantics = [#tpu.dimension_semantics<parallel>], iteration_bounds = array<i64: 2>, scalar_prefetch = 0 : i64, scratch_operands = 1 : i64, tpu.core_type = #tpu.core_type<tc>, window_params = [{transform_indices = @transform_0, window_bounds = array<i64: 16, 32>}, {pipeline_mode = #tpu.pipeline_mode<synchronous>, transform_indices = @transform_1, window_bounds = array<i64: 1, 32>}, {pipeline_mode = #tpu.pipeline_mode<synchronous>, transform_indices = @transform_2, window_bounds = array<i64: 1, 32>}, {pipeline_mode = #tpu.pipeline_mode<synchronous>, transform_indices = @transform_3, window_bounds = array<i64: 32, 64>}, {pipeline_mode = #tpu.pipeline_mode<synchronous>, transform_indices = @transform_4, window_bounds = array<i64: 1, 64>}, {pipeline_mode = #tpu.pipeline_mode<synchronous>, transform_indices = @transform_5, window_bounds = array<i64: 32, 64>}, {pipeline_mode = #tpu.pipeline_mode<synchronous>, transform_indices = @transform_6, window_bounds = array<i64: 1, 64>}, {pipeline_mode = #tpu.pipeline_mode<synchronous>, transform_indices = @transform_7, window_bounds = array<i64: 1, 64>}, {pipeline_mode = #tpu.pipeline_mode<synchronous>, transform_indices = @transform_8, window_bounds = array<i64: 1, 64>}, {pipeline_mode = #tpu.pipeline_mode<synchronous>, transform_indices = @transform_9, window_bounds = array<i64: 8, 8>}, {pipeline_mode = #tpu.pipeline_mode<synchronous>, transform_indices = @transform_10, window_bounds = array<i64: 8, 1>}, {pipeline_mode = #tpu.pipeline_mode<synchronous>, transform_indices = @transform_11, window_bounds = array<i64: 64, 32>}, {pipeline_mode = #tpu.pipeline_mode<synchronous>, transform_indices = @transform_12, window_bounds = array<i64: 1, 32>}, {transform_indices = @transform_13, window_bounds = array<i64: 16, 32>}]} {
    %c0 = arith.constant 0 : index
    %c0_0 = arith.constant 0 : index
    %0 = vector.load %arg1[%c0, %c0_0] : memref<16x32xf32, #tpu.memory_space<vmem>>, vector<16x32xf32>
    %c0_1 = arith.constant 0 : index
    %c0_2 = arith.constant 0 : index
    %1 = vector.load %arg2[%c0_1, %c0_2] : memref<1x32xf32, #tpu.memory_space<vmem>>, vector<1x32xf32>
    %2 = vector.shape_cast %1 : vector<1x32xf32> to vector<32xf32>
    %c0_3 = arith.constant 0 : index
    %c0_4 = arith.constant 0 : index
    %3 = vector.load %arg3[%c0_3, %c0_4] : memref<1x32xf32, #tpu.memory_space<vmem>>, vector<1x32xf32>
    %4 = vector.shape_cast %3 : vector<1x32xf32> to vector<32xf32>
    %cst = arith.constant dense<0.000000e+00> : vector<16xf32>
    %5 = vector.multi_reduction <add>, %0, %cst [1] : vector<16x32xf32> to vector<16xf32>
    %6 = vector.shape_cast %5 : vector<16xf32> to vector<16x1xf32>
    %cst_5 = arith.constant 3.200000e+01 : f32
    %7 = vector.broadcast %cst_5 : f32 to vector<16x1xf32>
    %8 = arith.divf %6, %7 : vector<16x1xf32>
    %9 = vector.broadcast %8 : vector<16x1xf32> to vector<16x32xf32>
    %10 = arith.subf %0, %9 : vector<16x32xf32>
    %11 = arith.mulf %10, %10 : vector<16x32xf32>
    %cst_6 = arith.constant dense<0.000000e+00> : vector<16xf32>
    %12 = vector.multi_reduction <add>, %11, %cst_6 [1] : vector<16x32xf32> to vector<16xf32>
    %13 = vector.shape_cast %12 : vector<16xf32> to vector<16x1xf32>
    %cst_7 = arith.constant 3.200000e+01 : f32
    %14 = vector.broadcast %cst_7 : f32 to vector<16x1xf32>
    %15 = arith.divf %13, %14 : vector<16x1xf32>
    %cst_8 = arith.constant 9.99999974E-6 : f32
    %16 = vector.broadcast %cst_8 : f32 to vector<16x1xf32>
    %17 = arith.addf %15, %16 : vector<16x1xf32>
    %18 = math.rsqrt %17 : vector<16x1xf32>
    %19 = vector.broadcast %18 : vector<16x1xf32> to vector<16x32xf32>
    %20 = arith.mulf %10, %19 : vector<16x32xf32>
    %21 = vector.shape_cast %2 : vector<32xf32> to vector<1x32xf32>
    %22 = vector.broadcast %21 : vector<1x32xf32> to vector<16x32xf32>
    %23 = arith.mulf %20, %22 : vector<16x32xf32>
    %24 = vector.shape_cast %4 : vector<32xf32> to vector<1x32xf32>
    %25 = vector.broadcast %24 : vector<1x32xf32> to vector<16x32xf32>
    %26 = arith.addf %23, %25 : vector<16x32xf32>
    %27 = arith.truncf %26 : vector<16x32xf32> to vector<16x32xbf16>
    %c0_9 = arith.constant 0 : index
    %c0_10 = arith.constant 0 : index
    %28 = vector.load %arg4[%c0_9, %c0_10] : memref<32x64xbf16, #tpu.memory_space<vmem>>, vector<32x64xbf16>
    %cst_11 = arith.constant dense<0.000000e+00> : vector<16x64xf32>
    %29 = tpu.matmul %27, %28, %cst_11 {dimension_numbers = #tpu.dot_dimension_numbers<[1], [0], [0], [1], [0, 0, 1, 1], [], []>} : vector<16x32xbf16>, vector<32x64xbf16>, vector<16x64xf32> -> vector<16x64xf32>
    %c0_12 = arith.constant 0 : index
    %c0_13 = arith.constant 0 : index
    %30 = vector.load %arg5[%c0_12, %c0_13] : memref<1x64xf32, #tpu.memory_space<vmem>>, vector<1x64xf32>
    %31 = vector.shape_cast %30 : vector<1x64xf32> to vector<64xf32>
    %32 = vector.shape_cast %31 : vector<64xf32> to vector<1x64xf32>
    %33 = vector.broadcast %32 : vector<1x64xf32> to vector<16x64xf32>
    %34 = arith.addf %29, %33 : vector<16x64xf32>
    %c0_14 = arith.constant 0 : index
    %c0_15 = arith.constant 0 : index
    %35 = vector.load %arg6[%c0_14, %c0_15] : memref<32x64xbf16, #tpu.memory_space<vmem>>, vector<32x64xbf16>
    %cst_16 = arith.constant dense<0.000000e+00> : vector<16x64xf32>
    %36 = tpu.matmul %27, %35, %cst_16 {dimension_numbers = #tpu.dot_dimension_numbers<[1], [0], [0], [1], [0, 0, 1, 1], [], []>} : vector<16x32xbf16>, vector<32x64xbf16>, vector<16x64xf32> -> vector<16x64xf32>
    %c0_17 = arith.constant 0 : index
    %c0_18 = arith.constant 0 : index
    %37 = vector.load %arg7[%c0_17, %c0_18] : memref<1x64xf32, #tpu.memory_space<vmem>>, vector<1x64xf32>
    %38 = vector.shape_cast %37 : vector<1x64xf32> to vector<64xf32>
    %39 = vector.shape_cast %38 : vector<64xf32> to vector<1x64xf32>
    %40 = vector.broadcast %39 : vector<1x64xf32> to vector<16x64xf32>
    %41 = arith.addf %36, %40 : vector<16x64xf32>
    %cst_19 = arith.constant 5.000000e-01 : f32
    %42 = vector.broadcast %cst_19 : f32 to vector<16x64xf32>
    %43 = arith.mulf %42, %34 : vector<16x64xf32>
    %cst_20 = arith.constant 0.707106769 : f32
    %44 = vector.broadcast %cst_20 : f32 to vector<16x64xf32>
    %45 = arith.mulf %34, %44 : vector<16x64xf32>
    %46 = math.erf %45 : vector<16x64xf32>
    %cst_21 = arith.constant 1.000000e+00 : f32
    %47 = vector.broadcast %cst_21 : f32 to vector<16x64xf32>
    %48 = arith.addf %47, %46 : vector<16x64xf32>
    %49 = arith.mulf %43, %48 : vector<16x64xf32>
    %cst_22 = arith.constant 5.000000e-01 : f32
    %50 = vector.broadcast %cst_22 : f32 to vector<16x64xf32>
    %51 = arith.mulf %50, %41 : vector<16x64xf32>
    %cst_23 = arith.constant 0.707106769 : f32
    %52 = vector.broadcast %cst_23 : f32 to vector<16x64xf32>
    %53 = arith.mulf %41, %52 : vector<16x64xf32>
    %54 = math.erf %53 : vector<16x64xf32>
    %cst_24 = arith.constant 1.000000e+00 : f32
    %55 = vector.broadcast %cst_24 : f32 to vector<16x64xf32>
    %56 = arith.addf %55, %54 : vector<16x64xf32>
    %57 = arith.mulf %51, %56 : vector<16x64xf32>
    %c0_25 = arith.constant 0 : index
    %c0_26 = arith.constant 0 : index
    %58 = vector.load %arg8[%c0_25, %c0_26] : memref<1x64xf32, #tpu.memory_space<vmem>>, vector<1x64xf32>
    %59 = vector.shape_cast %58 : vector<1x64xf32> to vector<64xf32>
    %c0_27 = arith.constant 0 : index
    %c0_28 = arith.constant 0 : index
    %60 = vector.load %arg9[%c0_27, %c0_28] : memref<1x64xf32, #tpu.memory_space<vmem>>, vector<1x64xf32>
    %61 = vector.shape_cast %60 : vector<1x64xf32> to vector<64xf32>
    %cst_29 = arith.constant dense<0.000000e+00> : vector<16xf32>
    %62 = vector.multi_reduction <add>, %57, %cst_29 [1] : vector<16x64xf32> to vector<16xf32>
    %63 = vector.shape_cast %62 : vector<16xf32> to vector<16x1xf32>
    %cst_30 = arith.constant 6.400000e+01 : f32
    %64 = vector.broadcast %cst_30 : f32 to vector<16x1xf32>
    %65 = arith.divf %63, %64 : vector<16x1xf32>
    %66 = vector.broadcast %65 : vector<16x1xf32> to vector<16x64xf32>
    %67 = arith.subf %57, %66 : vector<16x64xf32>
    %68 = arith.mulf %67, %67 : vector<16x64xf32>
    %cst_31 = arith.constant dense<0.000000e+00> : vector<16xf32>
    %69 = vector.multi_reduction <add>, %68, %cst_31 [1] : vector<16x64xf32> to vector<16xf32>
    %70 = vector.shape_cast %69 : vector<16xf32> to vector<16x1xf32>
    %cst_32 = arith.constant 6.400000e+01 : f32
    %71 = vector.broadcast %cst_32 : f32 to vector<16x1xf32>
    %72 = arith.divf %70, %71 : vector<16x1xf32>
    %cst_33 = arith.constant 9.99999974E-6 : f32
    %73 = vector.broadcast %cst_33 : f32 to vector<16x1xf32>
    %74 = arith.addf %72, %73 : vector<16x1xf32>
    %75 = math.rsqrt %74 : vector<16x1xf32>
    %76 = vector.broadcast %75 : vector<16x1xf32> to vector<16x64xf32>
    %77 = arith.mulf %67, %76 : vector<16x64xf32>
    %78 = vector.shape_cast %59 : vector<64xf32> to vector<1x64xf32>
    %79 = vector.broadcast %78 : vector<1x64xf32> to vector<16x64xf32>
    %80 = arith.mulf %77, %79 : vector<16x64xf32>
    %81 = vector.shape_cast %61 : vector<64xf32> to vector<1x64xf32>
    %82 = vector.broadcast %81 : vector<1x64xf32> to vector<16x64xf32>
    %83 = arith.addf %80, %82 : vector<16x64xf32>
    %c0_34 = arith.constant 0 : index
    %c0_35 = arith.constant 0 : index
    %84 = vector.load %arg10[%c0_34, %c0_35] : memref<8x8xbf16, #tpu.memory_space<vmem>>, vector<8x8xbf16>
    %c0_36 = arith.constant 0 : index
    %c0_37 = arith.constant 0 : index
    %85 = vector.load %arg11[%c0_36, %c0_37] : memref<8x1xf32, #tpu.memory_space<vmem>>, vector<8x1xf32>
    %86 = vector.shape_cast %85 : vector<8x1xf32> to vector<8x1xf32>
    %87 = vector.broadcast %86 : vector<8x1xf32> to vector<8x64xf32>
    %88 = vector.extract_strided_slice %83 {offsets = [0, 0], sizes = [8, 64], strides = [1, 1]} : vector<16x64xf32> to vector<8x64xf32>
    %89 = arith.truncf %88 : vector<8x64xf32> to vector<8x64xbf16>
    %cst_38 = arith.constant dense<0.000000e+00> : vector<8x64xf32>
    %90 = tpu.matmul %84, %89, %cst_38 {dimension_numbers = #tpu.dot_dimension_numbers<[1], [0], [0], [1], [0, 0, 1, 1], [], []>} : vector<8x8xbf16>, vector<8x64xbf16>, vector<8x64xf32> -> vector<8x64xf32>
    %91 = arith.addf %90, %87 : vector<8x64xf32>
    %92 = vector.extract_strided_slice %49 {offsets = [0, 0], sizes = [8, 64], strides = [1, 1]} : vector<16x64xf32> to vector<8x64xf32>
    %93 = arith.mulf %92, %91 : vector<8x64xf32>
    %c0_39 = arith.constant 0 : index
    %c0_40 = arith.constant 0 : index
    %94 = vector.load %arg15[%c0_39, %c0_40] : memref<16x64xf32, #tpu.memory_space<vmem>>, vector<8x64xf32>
    tpu.vector_store %arg15[%c0_39, %c0_40], %93 {strides = array<i32>} : memref<16x64xf32, #tpu.memory_space<vmem>>, vector<8x64xf32>,
    %95 = vector.extract_strided_slice %83 {offsets = [8, 0], sizes = [8, 64], strides = [1, 1]} : vector<16x64xf32> to vector<8x64xf32>
    %96 = arith.truncf %95 : vector<8x64xf32> to vector<8x64xbf16>
    %cst_41 = arith.constant dense<0.000000e+00> : vector<8x64xf32>
    %97 = tpu.matmul %84, %96, %cst_41 {dimension_numbers = #tpu.dot_dimension_numbers<[1], [0], [0], [1], [0, 0, 1, 1], [], []>} : vector<8x8xbf16>, vector<8x64xbf16>, vector<8x64xf32> -> vector<8x64xf32>
    %98 = arith.addf %97, %87 : vector<8x64xf32>
    %99 = vector.extract_strided_slice %49 {offsets = [8, 0], sizes = [8, 64], strides = [1, 1]} : vector<16x64xf32> to vector<8x64xf32>
    %100 = arith.mulf %99, %98 : vector<8x64xf32>
    %c8 = arith.constant 8 : index
    %c0_42 = arith.constant 0 : index
    %101 = vector.load %arg15[%c8, %c0_42] : memref<16x64xf32, #tpu.memory_space<vmem>>, vector<8x64xf32>
    tpu.vector_store %arg15[%c8, %c0_42], %100 {strides = array<i32>} : memref<16x64xf32, #tpu.memory_space<vmem>>, vector<8x64xf32>,
    %c0_43 = arith.constant 0 : index
    %c0_44 = arith.constant 0 : index
    %102 = vector.load %arg15[%c0_43, %c0_44] : memref<16x64xf32, #tpu.memory_space<vmem>>, vector<16x64xf32>
    %103 = arith.truncf %102 : vector<16x64xf32> to vector<16x64xbf16>
    %c0_45 = arith.constant 0 : index
    %c0_46 = arith.constant 0 : index
    %104 = vector.load %arg12[%c0_45, %c0_46] : memref<64x32xbf16, #tpu.memory_space<vmem>>, vector<64x32xbf16>
    %cst_47 = arith.constant dense<0.000000e+00> : vector<16x32xf32>
    %105 = tpu.matmul %103, %104, %cst_47 {dimension_numbers = #tpu.dot_dimension_numbers<[1], [0], [0], [1], [0, 0, 1, 1], [], []>} : vector<16x64xbf16>, vector<64x32xbf16>, vector<16x32xf32> -> vector<16x32xf32>
    %c0_48 = arith.constant 0 : index
    %c0_49 = arith.constant 0 : index
    %106 = vector.load %arg13[%c0_48, %c0_49] : memref<1x32xf32, #tpu.memory_space<vmem>>, vector<1x32xf32>
    %107 = vector.shape_cast %106 : vector<1x32xf32> to vector<32xf32>
    %108 = vector.shape_cast %107 : vector<32xf32> to vector<1x32xf32>
    %109 = vector.broadcast %108 : vector<1x32xf32> to vector<16x32xf32>
    %110 = arith.addf %105, %109 : vector<16x32xf32>
    %c0_50 = arith.constant 0 : index
    %c0_51 = arith.constant 0 : index
    %111 = vector.load %arg14[%c0_50, %c0_51] : memref<16x32xf32, #tpu.memory_space<vmem>>, vector<16x32xf32>
    tpu.vector_store %arg14[%c0_50, %c0_51], %110 {strides = array<i32>} : memref<16x32xf32, #tpu.memory_space<vmem>>, vector<16x32xf32>,
    return
  }
  func.func @transform_0(%arg0: i32) -> (i32, i32) {
    %c0_i32 = arith.constant 0 : i32
    %c0_i32_0 = arith.constant 0 : i32
    return %arg0, %c0_i32 : i32, i32
  }
  func.func @transform_1(%arg0: i32) -> (i32, i32) {
    %c0_i32 = arith.constant 0 : i32
    %c0_i32_0 = arith.constant 0 : i32
    %c0_i32_1 = arith.constant 0 : i32
    return %c0_i32, %c0_i32_0 : i32, i32
  }
  func.func @transform_2(%arg0: i32) -> (i32, i32) {
    %c0_i32 = arith.constant 0 : i32
    %c0_i32_0 = arith.constant 0 : i32
    %c0_i32_1 = arith.constant 0 : i32
    return %c0_i32, %c0_i32_0 : i32, i32
  }
  func.func @transform_3(%arg0: i32) -> (i32, i32) {
    %c0_i32 = arith.constant 0 : i32
    %c0_i32_0 = arith.constant 0 : i32
    %c0_i32_1 = arith.constant 0 : i32
    return %c0_i32, %c0_i32_0 : i32, i32
  }
  func.func @transform_4(%arg0: i32) -> (i32, i32) {
    %c0_i32 = arith.constant 0 : i32
    %c0_i32_0 = arith.constant 0 : i32
    %c0_i32_1 = arith.constant 0 : i32
    return %c0_i32, %c0_i32_0 : i32, i32
  }
  func.func @transform_5(%arg0: i32) -> (i32, i32) {
    %c0_i32 = arith.constant 0 : i32
    %c0_i32_0 = arith.constant 0 : i32
    %c0_i32_1 = arith.constant 0 : i32
    return %c0_i32, %c0_i32_0 : i32, i32
  }
  func.func @transform_6(%arg0: i32) -> (i32, i32) {
    %c0_i32 = arith.constant 0 : i32
    %c0_i32_0 = arith.constant 0 : i32
    %c0_i32_1 = arith.constant 0 : i32
    return %c0_i32, %c0_i32_0 : i32, i32
  }
  func.func @transform_7(%arg0: i32) -> (i32, i32) {
    %c0_i32 = arith.constant 0 : i32
    %c0_i32_0 = arith.constant 0 : i32
    %c0_i32_1 = arith.constant 0 : i32
    return %c0_i32, %c0_i32_0 : i32, i32
  }
  func.func @transform_8(%arg0: i32) -> (i32, i32) {
    %c0_i32 = arith.constant 0 : i32
    %c0_i32_0 = arith.constant 0 : i32
    %c0_i32_1 = arith.constant 0 : i32
    return %c0_i32, %c0_i32_0 : i32, i32
  }
  func.func @transform_9(%arg0: i32) -> (i32, i32) {
    %c0_i32 = arith.constant 0 : i32
    %c0_i32_0 = arith.constant 0 : i32
    %c0_i32_1 = arith.constant 0 : i32
    return %c0_i32, %c0_i32_0 : i32, i32
  }
  func.func @transform_10(%arg0: i32) -> (i32, i32) {
    %c0_i32 = arith.constant 0 : i32
    %c0_i32_0 = arith.constant 0 : i32
    %c0_i32_1 = arith.constant 0 : i32
    return %c0_i32, %c0_i32_0 : i32, i32
  }
  func.func @transform_11(%arg0: i32) -> (i32, i32) {
    %c0_i32 = arith.constant 0 : i32
    %c0_i32_0 = arith.constant 0 : i32
    %c0_i32_1 = arith.constant 0 : i32
    return %c0_i32, %c0_i32_0 : i32, i32
  }
  func.func @transform_12(%arg0: i32) -> (i32, i32) {
    %c0_i32 = arith.constant 0 : i32
    %c0_i32_0 = arith.constant 0 : i32
    %c0_i32_1 = arith.constant 0 : i32
    return %c0_i32, %c0_i32_0 : i32, i32
  }
  func.func @transform_13(%arg0: i32) -> (i32, i32) {
    %c0_i32 = arith.constant 0 : i32
    %c0_i32_0 = arith.constant 0 : i32
    return %arg0, %c0_i32 : i32, i32
  }
}

</mosaic_0001>

<llo_original>
// kernel: gmlp_block.1
$region0: #{gmlp_block.1}
  #allocation0 [shape = 'u32[]', space=smem, size = 0x4, offset = 0x4, fixed_abs, tag = 'smem constant byte address 0x4 - core index']
  #allocation1 [shape = 'u32[144,128]{1,0:T(1,128)}', space=vmem, size = 0x12000, scoped, tag = 'internal scratch']
  #allocation2 [shape = 'f32[16,64]{1,0:T(8,128)}', space=vmem, size = 0x2000, scoped, tag = 'scratch operand']
  %s0 = inlined_call_operand.vmem [shape: f32[32,32], index: 0, kind: input, shape index: {}]
  %s1 = inlined_call_operand.vmem [shape: f32[1,32], index: 1, kind: input, shape index: {}]
  %s2 = inlined_call_operand.vmem [shape: f32[1,32], index: 2, kind: input, shape index: {}]
  %s3 = inlined_call_operand.vmem [shape: bf16[32,64], index: 3, kind: input, shape index: {}]
  %s4 = inlined_call_operand.vmem [shape: f32[1,64], index: 4, kind: input, shape index: {}]
  %s5 = inlined_call_operand.vmem [shape: bf16[32,64], index: 5, kind: input, shape index: {}]
  %s6 = inlined_call_operand.hbm [shape: f32[1,64], index: 6, kind: input, shape index: {}]
  %s7 = inlined_call_operand.vmem [shape: f32[1,64], index: 7, kind: input, shape index: {}]
  %s8 = inlined_call_operand.vmem [shape: f32[1,64], index: 8, kind: input, shape index: {}]
  %s9 = inlined_call_operand.vmem [shape: bf16[8,8], index: 9, kind: input, shape index: {}]
  %s10 = inlined_call_operand.vmem [shape: f32[8,1], index: 10, kind: input, shape index: {}]
  %s11 = inlined_call_operand.vmem [shape: bf16[64,32], index: 11, kind: input, shape index: {}]
  %s12 = inlined_call_operand.vmem [shape: f32[1,32], index: 12, kind: input, shape index: {}]
  %s13 = inlined_call_operand.hbm [shape: f32[32,32], index: 13, kind: output, shape index: {}]
  %s14 = sld [smem:[#allocation0]]
  $region89: #{gmlp_block.1} parent=0
    _
  %s16 = ssub.s32 1, %s14
  %s17 = scalar_select 0, %s16, %s14
  $region1: #{gmlp_block.1} parent=0
    #allocation3 [shape = 'u8[512]{0}', space=vmem, size = 0x400, scoped, tag = 'input window, operand 6, single buffered']
    #allocation4 [shape = 's32[2]{0}', space=sflag, size = 0x8, scoped, tag = 'scoped memory for gmlp_block.1']
    #allocation5 [shape = 's32[2]{0}', space=sflag, size = 0x8, scoped, tag = 'scoped memory for gmlp_block.1']
    #allocation6 [shape = 'u8[16384]{0}', space=vmem, size = 0x4000, scoped, tag = 'output window, operand 0']
    %18 = vsyncpa [#allocation4], 0
    %19 = vsyncpa [#allocation5], 0
    %s20 = scalar_lea.sflag [#allocation5], 1
    %21 = vsyncpa %s20, 0
    loop: start=0, step=1, limit=4
    $region2: #{gmlp_block.1} parent=1 // loop_pre_header
      _
    $region3: #{gmlp_block.1} parent=1 // loop_header
      %s23 = sphi 0, %s27
      %p24 = scmp.ge.s32.totalorder %s23, 4
      %s33 = sphi 0, %s35
      %s36 = sphi 0, %s33
      %s37 = sphi 0, %s36
      %s53 = sphi 0, %s37
      %s57 = sphi 0, %s57
      %s59 = sphi 0, %s57
      %s60 = sphi 0, %s59
      %s74 = sphi 0, %s60
      %s78 = sphi 0, %s78
      %s80 = sphi 0, %s78
      %s81 = sphi 0, %s80
      %s95 = sphi 0, %s81
      %s99 = sphi 0, %s99
      %s101 = sphi 0, %s99
      %s102 = sphi 0, %s101
      %s116 = sphi 0, %s102
      %s120 = sphi 0, %s120
      %s122 = sphi 0, %s120
      %s123 = sphi 0, %s122
      %s137 = sphi 0, %s123
      %s141 = sphi 0, %s141
      %s143 = sphi 0, %s141
      %s144 = sphi 0, %s143
      %s158 = sphi 0, %s144
      %s162 = sphi 0, %s162
      %s164 = sphi 0, %s162
      %s165 = sphi 0, %s164
      %s179 = sphi 0, %s165
      %s183 = sphi 0, %s183
      %s185 = sphi 0, %s183
      %s186 = sphi 0, %s185
      %s200 = sphi 0, %s186
      %s204 = sphi 0, %s204
      %s206 = sphi 0, %s204
      %s207 = sphi 0, %s206
      %s221 = sphi 0, %s207
      %s225 = sphi 0, %s225
      %s227 = sphi 0, %s225
      %s228 = sphi 0, %s227
      %s242 = sphi 0, %s228
      %s246 = sphi 0, %s246
      %s248 = sphi 0, %s246
      %s249 = sphi 0, %s248
      %s263 = sphi 0, %s249
      %s267 = sphi 0, %s267
      %s269 = sphi 0, %s267
      %s270 = sphi 0, %s269
      %s284 = sphi 0, %s270
      %s288 = sphi 0, %s288
      %s290 = sphi 0, %s288
      %s291 = sphi 0, %s290
      %s305 = sphi 0, %s291
      %s311 = sphi 0, %s313
      %s314 = sphi 0, %s311
      %s315 = sphi 0, %s314
      %s331 = sphi 0, %s315
    $region4: #{gmlp_block.1} parent=1 // loop_header_branch
      %26 = sbr.rel (%p24) target = $region8
    $region5: #{gmlp_block.1} parent=1 // loop_body
      %s28 = ssub.s32 %s23, 1
      %s29 = ssub.s32 %s23, 2
      %s30 = sadd.s32 %s23, 1
      %s31 = ssub.s32 %s23, %s30
      %p32 = scmp.eq.s32.totalorder %s31, 0
      %s34 = sadd.s32 %s33, 1
      %s35 = scalar_select %p32, %s33, %s34
      %p38 = pneg %p32
      %p39 = scmp.eq.s32.totalorder %s23, 1
      %p40 = por %p38, %p39
      %p41 = scmp.ne.s32.totalorder %s33, %s36
      %p42 = scmp.eq.s32.totalorder %s23, 0
      %p43 = por %p41, %p42
      %p44 = scmp.ne.s32.totalorder %s33, %s36
      %p45 = scmp.eq.s32.totalorder %s28, 1
      %p46 = por %p44, %p45
      %p47 = scmp.ne.s32.totalorder %s36, %s37
      %p48 = scmp.eq.s32.totalorder %s28, 0
      %p49 = por %p47, %p48
      %p50 = scmp.ne.s32.totalorder %s36, %s37
      %p51 = scmp.eq.s32.totalorder %s29, 1
      %p52 = por %p50, %p51
      %p54 = scmp.ne.s32.totalorder %s37, %s53
      %p55 = scmp.eq.s32.totalorder %s29, 0
      %p56 = por %p54, %p55
      %s58 = sadd.s32 %s57, 1
      %p61 = scmp.eq.s32.totalorder %s23, 1
      %p62 = scmp.ne.s32.totalorder %s57, %s59
      %p63 = scmp.eq.s32.totalorder %s23, 0
      %p64 = por %p62, %p63
      %p65 = scmp.ne.s32.totalorder %s57, %s59
      %p66 = scmp.eq.s32.totalorder %s28, 1
      %p67 = por %p65, %p66
      %p68 = scmp.ne.s32.totalorder %s59, %s60
      %p69 = scmp.eq.s32.totalorder %s28, 0
      %p70 = por %p68, %p69
      %p71 = scmp.ne.s32.totalorder %s59, %s60
      %p72 = scmp.eq.s32.totalorder %s29, 1
      %p73 = por %p71, %p72
      %p75 = scmp.ne.s32.totalorder %s60, %s74
      %p76 = scmp.eq.s32.totalorder %s29, 0
      %p77 = por %p75, %p76
      %s79 = sadd.s32 %s78, 1
      %p82 = scmp.eq.s32.totalorder %s23, 1
      %p83 = scmp.ne.s32.totalorder %s78, %s80
      %p84 = scmp.eq.s32.totalorder %s23, 0
      %p85 = por %p83, %p84
      %p86 = scmp.ne.s32.totalorder %s78, %s80
      %p87 = scmp.eq.s32.totalorder %s28, 1
      %p88 = por %p86, %p87
      %p89 = scmp.ne.s32.totalorder %s80, %s81
      %p90 = scmp.eq.s32.totalorder %s28, 0
      %p91 = por %p89, %p90
      %p92 = scmp.ne.s32.totalorder %s80, %s81
      %p93 = scmp.eq.s32.totalorder %s29, 1
      %p94 = por %p92, %p93
      %p96 = scmp.ne.s32.totalorder %s81, %s95
      %p97 = scmp.eq.s32.totalorder %s29, 0
      %p98 = por %p96, %p97
      %s100 = sadd.s32 %s99, 1
      %p103 = scmp.eq.s32.totalorder %s23, 1
      %p104 = scmp.ne.s32.totalorder %s99, %s101
      %p105 = scmp.eq.s32.totalorder %s23, 0
      %p106 = por %p104, %p105
      %p107 = scmp.ne.s32.totalorder %s99, %s101
      %p108 = scmp.eq.s32.totalorder %s28, 1
      %p109 = por %p107, %p108
      %p110 = scmp.ne.s32.totalorder %s101, %s102
      %p111 = scmp.eq.s32.totalorder %s28, 0
      %p112 = por %p110, %p111
      %p113 = scmp.ne.s32.totalorder %s101, %s102
      %p114 = scmp.eq.s32.totalorder %s29, 1
      %p115 = por %p113, %p114
      %p117 = scmp.ne.s32.totalorder %s102, %s116
      %p118 = scmp.eq.s32.totalorder %s29, 0
      %p119 = por %p117, %p118
      %s121 = sadd.s32 %s120, 1
      %p124 = scmp.eq.s32.totalorder %s23, 1
      %p125 = scmp.ne.s32.totalorder %s120, %s122
      %p126 = scmp.eq.s32.totalorder %s23, 0
      %p127 = por %p125, %p126
      %p128 = scmp.ne.s32.totalorder %s120, %s122
      %p129 = scmp.eq.s32.totalorder %s28, 1
      %p130 = por %p128, %p129
      %p131 = scmp.ne.s32.totalorder %s122, %s123
      %p132 = scmp.eq.s32.totalorder %s28, 0
      %p133 = por %p131, %p132
      %p134 = scmp.ne.s32.totalorder %s122, %s123
      %p135 = scmp.eq.s32.totalorder %s29, 1
      %p136 = por %p134, %p135
      %p138 = scmp.ne.s32.totalorder %s123, %s137
      %p139 = scmp.eq.s32.totalorder %s29, 0
      %p140 = por %p138, %p139
      %s142 = sadd.s32 %s141, 1
      %p145 = scmp.eq.s32.totalorder %s23, 1
      %p146 = scmp.ne.s32.totalorder %s141, %s143
      %p147 = scmp.eq.s32.totalorder %s23, 0
      %p148 = por %p146, %p147
      %p149 = scmp.ne.s32.totalorder %s141, %s143
      %p150 = scmp.eq.s32.totalorder %s28, 1
      %p151 = por %p149, %p150
      %p152 = scmp.ne.s32.totalorder %s143, %s144
      %p153 = scmp.eq.s32.totalorder %s28, 0
      %p154 = por %p152, %p153
      %p155 = scmp.ne.s32.totalorder %s143, %s144
      %p156 = scmp.eq.s32.totalorder %s29, 1
      %p157 = por %p155, %p156
      %p159 = scmp.ne.s32.totalorder %s144, %s158
      %p160 = scmp.eq.s32.totalorder %s29, 0
      %p161 = por %p159, %p160
      %s163 = sadd.s32 %s162, 1
      %p166 = scmp.eq.s32.totalorder %s23, 1
      %p167 = scmp.ne.s32.totalorder %s162, %s164
      %p168 = scmp.eq.s32.totalorder %s23, 0
      %p169 = por %p167, %p168
      %p170 = scmp.ne.s32.totalorder %s162, %s164
      %p171 = scmp.eq.s32.totalorder %s28, 1
      %p172 = por %p170, %p171
      %p173 = scmp.ne.s32.totalorder %s164, %s165
      %p174 = scmp.eq.s32.totalorder %s28, 0
      %p175 = por %p173, %p174
      %p176 = scmp.ne.s32.totalorder %s164, %s165
      %p177 = scmp.eq.s32.totalorder %s29, 1
      %p178 = por %p176, %p177
      %p180 = scmp.ne.s32.totalorder %s165, %s179
      %p181 = scmp.eq.s32.totalorder %s29, 0
      %p182 = por %p180, %p181
      %s184 = sadd.s32 %s183, 1
      %p187 = scmp.eq.s32.totalorder %s23, 1
      %p188 = scmp.ne.s32.totalorder %s183, %s185
      %p189 = scmp.eq.s32.totalorder %s23, 0
      %p190 = por %p188, %p189
      %p191 = scmp.ne.s32.totalorder %s183, %s185
      %p192 = scmp.eq.s32.totalorder %s28, 1
      %p193 = por %p191, %p192
      %p194 = scmp.ne.s32.totalorder %s185, %s186
      %p195 = scmp.eq.s32.totalorder %s28, 0
      %p196 = por %p194, %p195
      %p197 = scmp.ne.s32.totalorder %s185, %s186
      %p198 = scmp.eq.s32.totalorder %s29, 1
      %p199 = por %p197, %p198
      %p201 = scmp.ne.s32.totalorder %s186, %s200
      %p202 = scmp.eq.s32.totalorder %s29, 0
      %p203 = por %p201, %p202
      %s205 = sadd.s32 %s204, 1
      %p208 = scmp.eq.s32.totalorder %s23, 1
      %p209 = scmp.ne.s32.totalorder %s204, %s206
      %p210 = scmp.eq.s32.totalorder %s23, 0
      %p211 = por %p209, %p210
      %p212 = scmp.ne.s32.totalorder %s204, %s206
      %p213 = scmp.eq.s32.totalorder %s28, 1
      %p214 = por %p212, %p213
      %p215 = scmp.ne.s32.totalorder %s206, %s207
      %p216 = scmp.eq.s32.totalorder %s28, 0
      %p217 = por %p215, %p216
      %p218 = scmp.ne.s32.totalorder %s206, %s207
      %p219 = scmp.eq.s32.totalorder %s29, 1
      %p220 = por %p218, %p219
      %p222 = scmp.ne.s32.totalorder %s207, %s221
      %p223 = scmp.eq.s32.totalorder %s29, 0
      %p224 = por %p222, %p223
      %s226 = sadd.s32 %s225, 1
      %p229 = scmp.eq.s32.totalorder %s23, 1
      %p230 = scmp.ne.s32.totalorder %s225, %s227
      %p231 = scmp.eq.s32.totalorder %s23, 0
      %p232 = por %p230, %p231
      %p233 = scmp.ne.s32.totalorder %s225, %s227
      %p234 = scmp.eq.s32.totalorder %s28, 1
      %p235 = por %p233, %p234
      %p236 = scmp.ne.s32.totalorder %s227, %s228
      %p237 = scmp.eq.s32.totalorder %s28, 0
      %p238 = por %p236, %p237
      %p239 = scmp.ne.s32.totalorder %s227, %s228
      %p240 = scmp.eq.s32.totalorder %s29, 1
      %p241 = por %p239, %p240
      %p243 = scmp.ne.s32.totalorder %s228, %s242
      %p244 = scmp.eq.s32.totalorder %s29, 0
      %p245 = por %p243, %p244
      %s247 = sadd.s32 %s246, 1
      %p250 = scmp.eq.s32.totalorder %s23, 1
      %p251 = scmp.ne.s32.totalorder %s246, %s248
      %p252 = scmp.eq.s32.totalorder %s23, 0
      %p253 = por %p251, %p252
      %p254 = scmp.ne.s32.totalorder %s246, %s248
      %p255 = scmp.eq.s32.totalorder %s28, 1
      %p256 = por %p254, %p255
      %p257 = scmp.ne.s32.totalorder %s248, %s249
      %p258 = scmp.eq.s32.totalorder %s28, 0
      %p259 = por %p257, %p258
      %p260 = scmp.ne.s32.totalorder %s248, %s249
      %p261 = scmp.eq.s32.totalorder %s29, 1
      %p262 = por %p260, %p261
      %p264 = scmp.ne.s32.totalorder %s249, %s263
      %p265 = scmp.eq.s32.totalorder %s29, 0
      %p266 = por %p264, %p265
      %s268 = sadd.s32 %s267, 1
      %p271 = scmp.eq.s32.totalorder %s23, 1
      %p272 = scmp.ne.s32.totalorder %s267, %s269
      %p273 = scmp.eq.s32.totalorder %s23, 0
      %p274 = por %p272, %p273
      %p275 = scmp.ne.s32.totalorder %s267, %s269
      %p276 = scmp.eq.s32.totalorder %s28, 1
      %p277 = por %p275, %p276
      %p278 = scmp.ne.s32.totalorder %s269, %s270
      %p279 = scmp.eq.s32.totalorder %s28, 0
      %p280 = por %p278, %p279
      %p281 = scmp.ne.s32.totalorder %s269, %s270
      %p282 = scmp.eq.s32.totalorder %s29, 1
      %p283 = por %p281, %p282
      %p285 = scmp.ne.s32.totalorder %s270, %s284
      %p286 = scmp.eq.s32.totalorder %s29, 0
      %p287 = por %p285, %p286
      %s289 = sadd.s32 %s288, 1
      %p292 = scmp.eq.s32.totalorder %s23, 1
      %p293 = scmp.ne.s32.totalorder %s288, %s290
      %p294 = scmp.eq.s32.totalorder %s23, 0
      %p295 = por %p293, %p294
      %p296 = scmp.ne.s32.totalorder %s288, %s290
      %p297 = scmp.eq.s32.totalorder %s28, 1
      %p298 = por %p296, %p297
      %p299 = scmp.ne.s32.totalorder %s290, %s291
      %p300 = scmp.eq.s32.totalorder %s28, 0
      %p301 = por %p299, %p300
      %p302 = scmp.ne.s32.totalorder %s290, %s291
      %p303 = scmp.eq.s32.totalorder %s29, 1
      %p304 = por %p302, %p303
      %p306 = scmp.ne.s32.totalorder %s291, %s305
      %p307 = scmp.eq.s32.totalorder %s29, 0
      %p308 = por %p306, %p307
      %s309 = ssub.s32 %s23, %s30
      %p310 = scmp.eq.s32.totalorder %s309, 0
      %s312 = sadd.s32 %s311, 1
      %s313 = scalar_select %p310, %s311, %s312
      %p316 = pneg %p310
      %p317 = scmp.eq.s32.totalorder %s23, 1
      %p318 = por %p316, %p317
      %p319 = scmp.ne.s32.totalorder %s311, %s314
      %p320 = scmp.eq.s32.totalorder %s23, 0
      %p321 = por %p319, %p320
      %p322 = scmp.ne.s32.totalorder %s311, %s314
      %p323 = scmp.eq.s32.totalorder %s28, 1
      %p324 = por %p322, %p323
      %p325 = scmp.ne.s32.totalorder %s314, %s315
      %p326 = scmp.eq.s32.totalorder %s28, 0
      %p327 = por %p325, %p326
      %p328 = scmp.ne.s32.totalorder %s314, %s315
      %p329 = scmp.eq.s32.totalorder %s29, 1
      %p330 = por %p328, %p329
      %p332 = scmp.ne.s32.totalorder %s315, %s331
      %p333 = scmp.eq.s32.totalorder %s29, 0
      %p334 = por %p332, %p333
      %p335 = scmp.le.s32.totalorder 1, %s23
      %p336 = scmp.lt.s32.totalorder %s23, 3
      %p337 = pnand %p335, %p336
      %p338 = pneg %p337
      // Predicated region
      $region9: #{gmlp_block.1} parent=5 // pred_check
        _
      $region10: #{gmlp_block.1} parent=5 // pred_check_branch
        %340 = sbr.rel (%p337) target = $region12
      $region11: #{gmlp_block.1} parent=5 // pred_region
        %s341 = ssub.s32 %s23, 1
        // Predicated region
        $region13: #{gmlp_block.1} parent=11 // pred_check
          %p342 = pneg %p70
        $region14: #{gmlp_block.1} parent=11 // pred_check_branch
          %344 = sbr.rel (%p342) target = $region16
        $region15: #{gmlp_block.1} parent=11 // pred_region
          _
        $region16: #{gmlp_block.1} parent=11 // pred_fallthru
          _
        // Predicated region
        $region17: #{gmlp_block.1} parent=11 // pred_check
          %p345 = pneg %p91
        $region18: #{gmlp_block.1} parent=11 // pred_check_branch
          %347 = sbr.rel (%p345) target = $region20
        $region19: #{gmlp_block.1} parent=11 // pred_region
          _
        $region20: #{gmlp_block.1} parent=11 // pred_fallthru
          _
        // Predicated region
        $region21: #{gmlp_block.1} parent=11 // pred_check
          %p348 = pneg %p112
        $region22: #{gmlp_block.1} parent=11 // pred_check_branch
          %350 = sbr.rel (%p348) target = $region24
        $region23: #{gmlp_block.1} parent=11 // pred_region
          _
        $region24: #{gmlp_block.1} parent=11 // pred_fallthru
          _
        // Predicated region
        $region25: #{gmlp_block.1} parent=11 // pred_check
          %p351 = pneg %p133
        $region26: #{gmlp_block.1} parent=11 // pred_check_branch
          %353 = sbr.rel (%p351) target = $region28
        $region27: #{gmlp_block.1} parent=11 // pred_region
          _
        $region28: #{gmlp_block.1} parent=11 // pred_fallthru
          _
        // Predicated region
        $region29: #{gmlp_block.1} parent=11 // pred_check
          %p354 = pneg %p154
        $region30: #{gmlp_block.1} parent=11 // pred_check_branch
          %356 = sbr.rel (%p354) target = $region32
        $region31: #{gmlp_block.1} parent=11 // pred_region
          _
        $region32: #{gmlp_block.1} parent=11 // pred_fallthru
          _
        // Predicated region
        $region33: #{gmlp_block.1} parent=11 // pred_check
          %p357 = pneg %p175
        $region34: #{gmlp_block.1} parent=11 // pred_check_branch
          %359 = sbr.rel (%p357) target = $region36
        $region35: #{gmlp_block.1} parent=11 // pred_region
          %s361 = ssub.s32 16, 16
          %362 = vsyncadd [#allocation4], %s361
          %s364 = sshll.u32 [#allocation3], 4
          %s365 = int_to_ptr.vmem [resolvable:$true] %s364
          %367 = dma.hbm_to_vmem [thread:$0]  %s6, 16, %s365, [#allocation4]
        $region36: #{gmlp_block.1} parent=11 // pred_fallthru
          _
        // Predicated region
        $region37: #{gmlp_block.1} parent=11 // pred_check
          %p368 = pneg %p196
        $region38: #{gmlp_block.1} parent=11 // pred_check_branch
          %370 = sbr.rel (%p368) target = $region40
        $region39: #{gmlp_block.1} parent=11 // pred_region
          _
        $region40: #{gmlp_block.1} parent=11 // pred_fallthru
          _
        // Predicated region
        $region41: #{gmlp_block.1} parent=11 // pred_check
          %p371 = pneg %p217
        $region42: #{gmlp_block.1} parent=11 // pred_check_branch
          %373 = sbr.rel (%p371) target = $region44
        $region43: #{gmlp_block.1} parent=11 // pred_region
          _
        $region44: #{gmlp_block.1} parent=11 // pred_fallthru
          _
        // Predicated region
        $region45: #{gmlp_block.1} parent=11 // pred_check
          %p374 = pneg %p238
        $region46: #{gmlp_block.1} parent=11 // pred_check_branch
          %376 = sbr.rel (%p374) target = $region48
        $region47: #{gmlp_block.1} parent=11 // pred_region
          _
        $region48: #{gmlp_block.1} parent=11 // pred_fallthru
          _
        // Predicated region
        $region49: #{gmlp_block.1} parent=11 // pred_check
          %p377 = pneg %p259
        $region50: #{gmlp_block.1} parent=11 // pred_check_branch
          %379 = sbr.rel (%p377) target = $region52
        $region51: #{gmlp_block.1} parent=11 // pred_region
          _
        $region52: #{gmlp_block.1} parent=11 // pred_fallthru
          _
        // Predicated region
        $region53: #{gmlp_block.1} parent=11 // pred_check
          %p380 = pneg %p280
        $region54: #{gmlp_block.1} parent=11 // pred_check_branch
          %382 = sbr.rel (%p380) target = $region56
        $region55: #{gmlp_block.1} parent=11 // pred_region
          _
        $region56: #{gmlp_block.1} parent=11 // pred_fallthru
          _
        // Predicated region
        $region57: #{gmlp_block.1} parent=11 // pred_check
          %p383 = pneg %p301
        $region58: #{gmlp_block.1} parent=11 // pred_check_branch
          %385 = sbr.rel (%p383) target = $region60
        $region59: #{gmlp_block.1} parent=11 // pred_region
          _
        $region60: #{gmlp_block.1} parent=11 // pred_fallthru
          _
      $region12: #{gmlp_block.1} parent=5 // pred_fallthru
        _
      %p386 = scmp.lt.s32.totalorder %s23, 2
      // Predicated region
      $region61: #{gmlp_block.1} parent=5 // pred_check
        %p387 = pneg %p386
      $region62: #{gmlp_block.1} parent=5 // pred_check_branch
        %389 = sbr.rel (%p387) target = $region64
      $region63: #{gmlp_block.1} parent=5 // pred_region
        // Predicated region
        $region65: #{gmlp_block.1} parent=63 // pred_check
          %p390 = pneg %p43
        $region66: #{gmlp_block.1} parent=63 // pred_check_branch
          %392 = sbr.rel (%p390) target = $region68
        $region67: #{gmlp_block.1} parent=63 // pred_region
          %s393 = smul.u32 2, %s23
          %p394 = scmp.lt.s32.totalorder %s393, 3
          %s395 = scalar_select %p394, %s393, 3
          %s396 = smul.addr %s395, 8
          %s397 = scalar_lea.vmem %s0, %s396
          %s398 = smul.u32 2, %s23
        $region68: #{gmlp_block.1} parent=63 // pred_fallthru
          _
      $region64: #{gmlp_block.1} parent=5 // pred_fallthru
        _
      %p399 = scmp.le.s32.totalorder 1, %s23
      %p400 = scmp.lt.s32.totalorder %s23, 3
      %p401 = pnand %p399, %p400
      %p402 = pneg %p401
      // Predicated region
      $region69: #{gmlp_block.1} parent=5 // pred_check
        _
      $region70: #{gmlp_block.1} parent=5 // pred_check_branch
        %404 = sbr.rel (%p401) target = $region72
      $region71: #{gmlp_block.1} parent=5 // pred_region
        %s405 = ssub.s32 %s23, 1
        // Predicated region
        $region73: #{gmlp_block.1} parent=71 // pred_check
          %p406 = pneg %p175
        $region74: #{gmlp_block.1} parent=71 // pred_check_branch
          %408 = sbr.rel (%p406) target = $region76
        $region75: #{gmlp_block.1} parent=71 // pred_region
          %409 = dma.done [#allocation4], 16
        $region76: #{gmlp_block.1} parent=71 // pred_fallthru
          _
        %s410 = smul.u32 2, %s28
        %p411 = scmp.lt.s32.totalorder %s410, 3
        %s412 = scalar_select %p411, %s410, 3
        %s413 = smul.addr %s412, 8
        %s414 = scalar_lea.vmem %s0, %s413
        %p415 = pneg %p49
        %p416 = pneg %p46
        %p417 = pneg %p70
        %p418 = pneg %p67
        %p419 = pneg %p91
        %p420 = pneg %p88
        %p421 = pneg %p112
        %p422 = pneg %p109
        %p423 = pneg %p133
        %p424 = pneg %p130
        %p425 = pneg %p154
        %p426 = pneg %p151
        %p427 = pneg %p175
        %p428 = pneg %p172
        %p429 = pneg %p196
        %p430 = pneg %p193
        %p431 = pneg %p217
        %p432 = pneg %p214
        %p433 = pneg %p238
        %p434 = pneg %p235
        %p435 = pneg %p259
        %p436 = pneg %p256
        %p437 = pneg %p280
        %p438 = pneg %p277
        %p439 = pneg %p301
        %p440 = pneg %p298
        %p441 = pneg %p327
        %p442 = pneg %p324
        %s443 = sand.u32 %s314, 1
        %s444 = scalar_lea.sflag [#allocation5], %s443
        %s445 = sand.u32 %s314, 1
        %s446 = smul.addr %s445, 16
        %s447 = scalar_lea.vmem [#allocation6], %s446
        %s448 = smul.u32 2, %s28
        %p449 = scmp.lt.s32.totalorder %s448, 3
        %s450 = scalar_select %p449, %s448, 3
        %s451 = smul.addr %s450, 8
        %s452 = scalar_lea.vmem %s0, %s451
        %s453 = smul.u32 2, %s28
        %s454 = smul.u32 2, %s28
        %v456 = vld [vmem:[%s452] sm:$0xff]
        %v457 = vld [vmem:[%s452 + $0x8] sm:$0xff]
        %v458 = vld [vmem:[%s1] sm:$0x1]
        %v459 = vld [vmem:[%s2] sm:$0x1]
        %vm460 = vcmask 261120
        %v461 = vsel %vm460, %v456, 0.0
        %462 = vadd.xlane.f32.xlu0 %v461
        %v463 = vpop.xlane.xlu0 %462
        %v464 = vsel %vm460, %v457, 0.0
        %465 = vadd.xlane.f32.xlu0 %v464
        %v466 = vpop.xlane.xlu0 %465
        %v467 = vrcp.pop 32.0
        %v468 = vmul.f32 %v463, %v467
        %v469 = vmul.f32 %v466, %v467
        %v470 = vsub.f32 %v456, %v468
        %v471 = vsub.f32 %v457, %v469
        %v472 = vmul.f32 %v470, %v470
        %v473 = vmul.f32 %v471, %v471
        %v474 = vsel %vm460, %v472, 0.0
        %475 = vadd.xlane.f32.xlu0 %v474
        %v476 = vpop.xlane.xlu0 %475
        %v477 = vsel %vm460, %v473, 0.0
        %478 = vadd.xlane.f32.xlu0 %v477
        %v479 = vpop.xlane.xlu0 %478
        %v480 = vmul.f32 %v476, %v467
        %v481 = vmul.f32 %v479, %v467
        %v482 = vadd.f32 %v480, 1e-05
        %v483 = vadd.f32 %v481, 1e-05
        %v484 = vrsqrt.pop %v482
        %v485 = vrsqrt.pop %v483
        %v486 = vmul.f32 %v470, %v484
        %v487 = vmul.f32 %v471, %v485
        %v489 = vlaneseq
        %v490 = vshrl.u32 %v489, 7
        %v491 = vsub.s32 0, %v490
        %v492 = vrot.slane %v458, %v491
        %v494 = vmul.f32 %v486, %v492
        %v495 = vmul.f32 %v487, %v492
        %v497 = vlaneseq
        %v498 = vshrl.u32 %v497, 7
        %v499 = vsub.s32 0, %v498
        %v500 = vrot.slane %v459, %v499
        %v502 = vadd.f32 %v494, %v500
        %v503 = vadd.f32 %v495, %v500
        %v504 = vpack.c.bf16 %v503, %v502
        %v505 = vld [vmem:[%s3] sm:$0xf]
        %v506 = vld [vmem:[%s3 + $0x4] sm:$0xf]
        %v507 = vld [vmem:[%s3 + $0x8] sm:$0xf]
        %v508 = vld [vmem:[%s3 + $0xc] sm:$0xf]
        %v509 = vld [vmem:[%s4] sm:$0x1]
        %v511 = vlaneseq
        %v512 = vshrl.u32 %v511, 7
        %v513 = vsub.s32 0, %v512
        %v514 = vrot.slane %v509, %v513
        %v520 = vunpack.c.l.b16 %v505
        %v521 = vunpack.c.l.b16 %v506
        %v522 = vunpack.c.l.b16 %v507
        %v523 = vunpack.c.l.b16 %v508
        %v524 = vpack.c.b16 %v521, %v520
        %v525 = vpack.c.b16 %v523, %v522
        %v529 = vsel %vm460, %v504, 0
        %531 = vmatprep.subr.bf16.mxu0 0
        %532 = vmatpush1.bf16.msra.mxu0 %v524
        %533 = vmatprep.subr.bf16.mxu0 0
        %534 = vmatpush1.bf16.msra.mxu0 %v525
        %535 = vmatprep.subr.bf16.mxu0 0
        %536 = vmatpush1.bf16.msra.mxu0 0
        %537 = vmatprep.subr.bf16.mxu0 0
        %538 = vmatpush1.bf16.msra.mxu0 0
        %539 = vmatprep.subr.bf16.mxu0 0
        %540 = vmatpush1.bf16.msra.mxu0 0
        %541 = vmatprep.subr.bf16.mxu0 0
        %542 = vmatpush1.bf16.msra.mxu0 0
        %543 = vmatprep.subr.bf16.mxu0 0
        %544 = vmatpush1.bf16.msra.mxu0 0
        %545 = vmatprep.subr.bf16.mxu0 0
        %546 = vmatpush1.bf16.msra.mxu0 0
        %547 = vmatprep.subr.bf16.mxu0 0
        %548 = vmatpush1.bf16.msra.mxu0 0
        %549 = vmatprep.subr.bf16.mxu0 0
        %550 = vmatpush1.bf16.msra.mxu0 0
        %551 = vmatprep.subr.bf16.mxu0 0
        %552 = vmatpush1.bf16.msra.mxu0 0
        %553 = vmatprep.subr.bf16.mxu0 0
        %554 = vmatpush1.bf16.msra.mxu0 0
        %555 = vmatprep.subr.bf16.mxu0 0
        %556 = vmatpush1.bf16.msra.mxu0 0
        %557 = vmatprep.subr.bf16.mxu0 0
        %558 = vmatpush1.bf16.msra.mxu0 0
        %559 = vmatprep.subr.bf16.mxu0 0
        %560 = vmatpush1.bf16.msra.mxu0 0
        %561 = vmatprep.subr.bf16.mxu0 0
        %562 = vmatpush1.bf16.msra.mxu0 0
        %563 = vmatprep.mubr.bf16.mxu0 0
        %564 = vmatmul.mubr.bf16.gmra.mrb[0].mxu0 %v529
        %v565 = vpop.f32.mrb[0].mxu0
        %v566 = vadd.f32 %v514, %v565
        %v567 = vpop.f32.mrb[0].mxu0
        %v568 = vpop.f32.mrb[0].mxu0
        %v569 = vadd.f32 %v514, %v568
        %v570 = vpop.f32.mrb[0].mxu0
        %571 = vdwg.mxu0
        %v572 = vld [vmem:[%s5] sm:$0xf]
        %v573 = vld [vmem:[%s5 + $0x4] sm:$0xf]
        %v574 = vld [vmem:[%s5 + $0x8] sm:$0xf]
        %v575 = vld [vmem:[%s5 + $0xc] sm:$0xf]
        %v576 = vld [vmem:[#allocation3] sm:$0x1]
        %v578 = vlaneseq
        %v579 = vshrl.u32 %v578, 7
        %v580 = vsub.s32 0, %v579
        %v581 = vrot.slane %v576, %v580
        %v587 = vunpack.c.l.b16 %v572
        %v588 = vunpack.c.l.b16 %v573
        %v589 = vunpack.c.l.b16 %v574
        %v590 = vunpack.c.l.b16 %v575
        %v591 = vpack.c.b16 %v588, %v587
        %v592 = vpack.c.b16 %v590, %v589
        %595 = vmatprep.subr.bf16.mxu0 0
        %596 = vmatpush1.bf16.msra.mxu0 %v591
        %597 = vmatprep.subr.bf16.mxu0 0
        %598 = vmatpush1.bf16.msra.mxu0 %v592
        %599 = vmatprep.subr.bf16.mxu0 0
        %600 = vmatpush1.bf16.msra.mxu0 0
        %601 = vmatprep.subr.bf16.mxu0 0
        %602 = vmatpush1.bf16.msra.mxu0 0
        %603 = vmatprep.subr.bf16.mxu0 0
        %604 = vmatpush1.bf16.msra.mxu0 0
        %605 = vmatprep.subr.bf16.mxu0 0
        %606 = vmatpush1.bf16.msra.mxu0 0
        %607 = vmatprep.subr.bf16.mxu0 0
        %608 = vmatpush1.bf16.msra.mxu0 0
        %609 = vmatprep.subr.bf16.mxu0 0
        %610 = vmatpush1.bf16.msra.mxu0 0
        %611 = vmatprep.subr.bf16.mxu0 0
        %612 = vmatpush1.bf16.msra.mxu0 0
        %613 = vmatprep.subr.bf16.mxu0 0
        %614 = vmatpush1.bf16.msra.mxu0 0
        %615 = vmatprep.subr.bf16.mxu0 0
        %616 = vmatpush1.bf16.msra.mxu0 0
        %617 = vmatprep.subr.bf16.mxu0 0
        %618 = vmatpush1.bf16.msra.mxu0 0
        %619 = vmatprep.subr.bf16.mxu0 0
        %620 = vmatpush1.bf16.msra.mxu0 0
        %621 = vmatprep.subr.bf16.mxu0 0
        %622 = vmatpush1.bf16.msra.mxu0 0
        %623 = vmatprep.subr.bf16.mxu0 0
        %624 = vmatpush1.bf16.msra.mxu0 0
        %625 = vmatprep.subr.bf16.mxu0 0
        %626 = vmatpush1.bf16.msra.mxu0 0
        %627 = vmatprep.mubr.bf16.mxu0 0
        %628 = vmatmul.mubr.bf16.gmra.mrb[0].mxu0 %v529
        %v629 = vpop.f32.mrb[0].mxu0
        %v630 = vadd.f32 %v581, %v629
        %v631 = vpop.f32.mrb[0].mxu0
        %v632 = vpop.f32.mrb[0].mxu0
        %v633 = vadd.f32 %v581, %v632
        %v634 = vpop.f32.mrb[0].mxu0
        %635 = vdwg.mxu0
        %v636 = vmul.f32 %v566, 0.5
        %v637 = vmul.f32 %v569, 0.5
        %v638 = vmul.f32 %v566, 0.70710677
        %v639 = vmul.f32 %v569, 0.70710677
        %v640 = verf.f32.pop %v638
        %v641 = verf.f32.pop %v639
        %v642 = vadd.f32 %v640, 1.0
        %v643 = vadd.f32 %v641, 1.0
        %v644 = vmul.f32 %v636, %v642
        %v645 = vmul.f32 %v637, %v643
        %v646 = vmul.f32 %v630, 0.5
        %v647 = vmul.f32 %v633, 0.5
        %v648 = vmul.f32 %v630, 0.70710677
        %v649 = vmul.f32 %v633, 0.70710677
        %v650 = verf.f32.pop %v648
        %v651 = verf.f32.pop %v649
        %v652 = vadd.f32 %v650, 1.0
        %v653 = vadd.f32 %v651, 1.0
        %v654 = vmul.f32 %v646, %v652
        %v655 = vmul.f32 %v647, %v653
        %v656 = vld [vmem:[%s7] sm:$0x1]
        %v657 = vld [vmem:[%s8] sm:$0x1]
        %vm658 = vcmask 523264
        %v659 = vsel %vm658, %v654, 0.0
        %660 = vadd.xlane.f32.xlu0 %v659
        %v661 = vpop.xlane.xlu0 %660
        %v662 = vsel %vm658, %v655, 0.0
        %663 = vadd.xlane.f32.xlu0 %v662
        %v664 = vpop.xlane.xlu0 %663
        %v665 = vrcp.pop 64.0
        %v666 = vmul.f32 %v661, %v665
        %v667 = vmul.f32 %v664, %v665
        %v668 = vsub.f32 %v654, %v666
        %v669 = vsub.f32 %v655, %v667
        %v670 = vmul.f32 %v668, %v668
        %v671 = vmul.f32 %v669, %v669
        %v672 = vsel %vm658, %v670, 0.0
        %673 = vadd.xlane.f32.xlu0 %v672
        %v674 = vpop.xlane.xlu0 %673
        %v675 = vsel %vm658, %v671, 0.0
        %676 = vadd.xlane.f32.xlu0 %v675
        %v677 = vpop.xlane.xlu0 %676
        %v678 = vmul.f32 %v674, %v665
        %v679 = vmul.f32 %v677, %v665
        %v680 = vadd.f32 %v678, 1e-05
        %v681 = vadd.f32 %v679, 1e-05
        %v682 = vrsqrt.pop %v680
        %v683 = vrsqrt.pop %v681
        %v684 = vmul.f32 %v668, %v682
        %v685 = vmul.f32 %v669, %v683
        %v687 = vlaneseq
        %v688 = vshrl.u32 %v687, 7
        %v689 = vsub.s32 0, %v688
        %v690 = vrot.slane %v656, %v689
        %v692 = vmul.f32 %v684, %v690
        %v693 = vmul.f32 %v685, %v690
        %v695 = vlaneseq
        %v696 = vshrl.u32 %v695, 7
        %v697 = vsub.s32 0, %v696
        %v698 = vrot.slane %v657, %v697
        %v700 = vadd.f32 %v692, %v698
        %v701 = vadd.f32 %v693, %v698
        %v702 = vld [vmem:[%s9] sm:$0xf]
        %v703 = vld [vmem:[%s10] sm:$0xff]
        %705 = vset.pattern.permute.xlu0 0
        %706 = vperm.xlu0 %705, %v703
        %v707 = vpop.permute.xlu0 %706
        %v709 = vpack.c.bf16 %v700, %v700
        %vm710 = vcmask 64512
        %v712 = vsel %vm710, %v702, 0
        %vm714 = vcmask 1043456
        %v716 = vsel %vm714, %v709, 0
        %718 = vmatprep.subr.bf16.mxu0 0
        %719 = vmatpush1.bf16.msra.mxu0 %v716
        %720 = vmatprep.subr.bf16.mxu0 0
        %721 = vmatpush1.bf16.msra.mxu0 0
        %722 = vmatprep.subr.bf16.mxu0 0
        %723 = vmatpush1.bf16.msra.mxu0 0
        %724 = vmatprep.subr.bf16.mxu0 0
        %725 = vmatpush1.bf16.msra.mxu0 0
        %726 = vmatprep.subr.bf16.mxu0 0
        %727 = vmatpush1.bf16.msra.mxu0 0
        %728 = vmatprep.subr.bf16.mxu0 0
        %729 = vmatpush1.bf16.msra.mxu0 0
        %730 = vmatprep.subr.bf16.mxu0 0
        %731 = vmatpush1.bf16.msra.mxu0 0
        %732 = vmatprep.subr.bf16.mxu0 0
        %733 = vmatpush1.bf16.msra.mxu0 0
        %734 = vmatprep.subr.bf16.mxu0 0
        %735 = vmatpush1.bf16.msra.mxu0 0
        %736 = vmatprep.subr.bf16.mxu0 0
        %737 = vmatpush1.bf16.msra.mxu0 0
        %738 = vmatprep.subr.bf16.mxu0 0
        %739 = vmatpush1.bf16.msra.mxu0 0
        %740 = vmatprep.subr.bf16.mxu0 0
        %741 = vmatpush1.bf16.msra.mxu0 0
        %742 = vmatprep.subr.bf16.mxu0 0
        %743 = vmatpush1.bf16.msra.mxu0 0
        %744 = vmatprep.subr.bf16.mxu0 0
        %745 = vmatpush1.bf16.msra.mxu0 0
        %746 = vmatprep.subr.bf16.mxu0 0
        %747 = vmatpush1.bf16.msra.mxu0 0
        %748 = vmatprep.subr.bf16.mxu0 0
        %749 = vmatpush1.bf16.msra.mxu0 0
        %750 = vmatprep.mubr.bf16.mxu0 0
        %751 = vmatmul.mubr.bf16.gmra.mrb[0].mxu0 %v712
        %v752 = vpop.f32.mrb[0].mxu0
        %v753 = vadd.f32 %v707, %v752
        %v754 = vpop.f32.mrb[0].mxu0
        %v755 = vpop.f32.mrb[0].mxu0
        %v756 = vpop.f32.mrb[0].mxu0
        %757 = vdwg.mxu0
        %v758 = vmul.f32 %v644, %v753
        %759 = vst.msk [vmem:[#allocation2] sm:$0xff] %vm658, %v758
        %v760 = vpack.c.bf16 %v701, %v701
        %v762 = vsel %vm714, %v760, 0
        %764 = vmatprep.subr.bf16.mxu0 0
        %765 = vmatpush1.bf16.msra.mxu0 %v762
        %766 = vmatprep.subr.bf16.mxu0 0
        %767 = vmatpush1.bf16.msra.mxu0 0
        %768 = vmatprep.subr.bf16.mxu0 0
        %769 = vmatpush1.bf16.msra.mxu0 0
        %770 = vmatprep.subr.bf16.mxu0 0
        %771 = vmatpush1.bf16.msra.mxu0 0
        %772 = vmatprep.subr.bf16.mxu0 0
        %773 = vmatpush1.bf16.msra.mxu0 0
        %774 = vmatprep.subr.bf16.mxu0 0
        %775 = vmatpush1.bf16.msra.mxu0 0
        %776 = vmatprep.subr.bf16.mxu0 0
        %777 = vmatpush1.bf16.msra.mxu0 0
        %778 = vmatprep.subr.bf16.mxu0 0
        %779 = vmatpush1.bf16.msra.mxu0 0
        %780 = vmatprep.subr.bf16.mxu0 0
        %781 = vmatpush1.bf16.msra.mxu0 0
        %782 = vmatprep.subr.bf16.mxu0 0
        %783 = vmatpush1.bf16.msra.mxu0 0
        %784 = vmatprep.subr.bf16.mxu0 0
        %785 = vmatpush1.bf16.msra.mxu0 0
        %786 = vmatprep.subr.bf16.mxu0 0
        %787 = vmatpush1.bf16.msra.mxu0 0
        %788 = vmatprep.subr.bf16.mxu0 0
        %789 = vmatpush1.bf16.msra.mxu0 0
        %790 = vmatprep.subr.bf16.mxu0 0
        %791 = vmatpush1.bf16.msra.mxu0 0
        %792 = vmatprep.subr.bf16.mxu0 0
        %793 = vmatpush1.bf16.msra.mxu0 0
        %794 = vmatprep.subr.bf16.mxu0 0
        %795 = vmatpush1.bf16.msra.mxu0 0
        %796 = vmatprep.mubr.bf16.mxu0 0
        %797 = vmatmul.mubr.bf16.gmra.mrb[0].mxu0 %v712
        %v798 = vpop.f32.mrb[0].mxu0
        %v799 = vadd.f32 %v707, %v798
        %v800 = vpop.f32.mrb[0].mxu0
        %v801 = vpop.f32.mrb[0].mxu0
        %v802 = vpop.f32.mrb[0].mxu0
        %803 = vdwg.mxu0
        %v804 = vmul.f32 %v645, %v799
        %805 = vst.msk [vmem:[#allocation2 + $0x8] sm:$0xff] %vm658, %v804
        %v806 = vld [vmem:[#allocation2] sm:$0xff]
        %v807 = vld [vmem:[#allocation2 + $0x8] sm:$0xff]
        %v808 = vpack.c.bf16 %v807, %v806
        %v809 = vld [vmem:[%s11] sm:$0xf]
        %v810 = vld [vmem:[%s11 + $0x4] sm:$0xf]
        %v811 = vld [vmem:[%s11 + $0x8] sm:$0xf]
        %v812 = vld [vmem:[%s11 + $0xc] sm:$0xf]
        %v813 = vld [vmem:[%s11 + $0x10] sm:$0xf]
        %v814 = vld [vmem:[%s11 + $0x14] sm:$0xf]
        %v815 = vld [vmem:[%s11 + $0x18] sm:$0xf]
        %v816 = vld [vmem:[%s11 + $0x1c] sm:$0xf]
        %v817 = vld [vmem:[%s12] sm:$0x1]
        %v819 = vlaneseq
        %v820 = vshrl.u32 %v819, 7
        %v821 = vsub.s32 0, %v820
        %v822 = vrot.slane %v817, %v821
        %v832 = vunpack.c.l.b16 %v809
        %v833 = vunpack.c.l.b16 %v810
        %v834 = vunpack.c.l.b16 %v811
        %v835 = vunpack.c.l.b16 %v812
        %v836 = vunpack.c.l.b16 %v813
        %v837 = vunpack.c.l.b16 %v814
        %v838 = vunpack.c.l.b16 %v815
        %v839 = vunpack.c.l.b16 %v816
        %v840 = vpack.c.b16 %v833, %v832
        %v841 = vpack.c.b16 %v835, %v834
        %v842 = vpack.c.b16 %v837, %v836
        %v843 = vpack.c.b16 %v839, %v838
        %v849 = vsel %vm658, %v808, 0
        %851 = vmatprep.subr.bf16.mxu0 0
        %852 = vmatpush1.bf16.msra.mxu0 %v840
        %853 = vmatprep.subr.bf16.mxu0 0
        %854 = vmatpush1.bf16.msra.mxu0 %v841
        %855 = vmatprep.subr.bf16.mxu0 0
        %856 = vmatpush1.bf16.msra.mxu0 %v842
        %857 = vmatprep.subr.bf16.mxu0 0
        %858 = vmatpush1.bf16.msra.mxu0 %v843
        %859 = vmatprep.subr.bf16.mxu0 0
        %860 = vmatpush1.bf16.msra.mxu0 0
        %861 = vmatprep.subr.bf16.mxu0 0
        %862 = vmatpush1.bf16.msra.mxu0 0
        %863 = vmatprep.subr.bf16.mxu0 0
        %864 = vmatpush1.bf16.msra.mxu0 0
        %865 = vmatprep.subr.bf16.mxu0 0
        %866 = vmatpush1.bf16.msra.mxu0 0
        %867 = vmatprep.subr.bf16.mxu0 0
        %868 = vmatpush1.bf16.msra.mxu0 0
        %869 = vmatprep.subr.bf16.mxu0 0
        %870 = vmatpush1.bf16.msra.mxu0 0
        %871 = vmatprep.subr.bf16.mxu0 0
        %872 = vmatpush1.bf16.msra.mxu0 0
        %873 = vmatprep.subr.bf16.mxu0 0
        %874 = vmatpush1.bf16.msra.mxu0 0
        %875 = vmatprep.subr.bf16.mxu0 0
        %876 = vmatpush1.bf16.msra.mxu0 0
        %877 = vmatprep.subr.bf16.mxu0 0
        %878 = vmatpush1.bf16.msra.mxu0 0
        %879 = vmatprep.subr.bf16.mxu0 0
        %880 = vmatpush1.bf16.msra.mxu0 0
        %881 = vmatprep.subr.bf16.mxu0 0
        %882 = vmatpush1.bf16.msra.mxu0 0
        %883 = vmatprep.mubr.bf16.mxu0 0
        %884 = vmatmul.mubr.bf16.gmra.mrb[0].mxu0 %v849
        %v885 = vpop.f32.mrb[0].mxu0
        %v886 = vadd.f32 %v822, %v885
        %v887 = vpop.f32.mrb[0].mxu0
        %v888 = vpop.f32.mrb[0].mxu0
        %v889 = vadd.f32 %v822, %v888
        %v890 = vpop.f32.mrb[0].mxu0
        %891 = vdwg.mxu0
        %892 = vst.msk [vmem:[%s447] sm:$0xff] %vm460, %v886
        %893 = vst.msk [vmem:[%s447 + $0x8] sm:$0xff] %vm460, %v889
        %s894 = sand.u32 %s314, 1
        %s895 = scalar_lea.sflag [#allocation5], %s894
        %s896 = sand.u32 %s314, 1
        %s897 = smul.addr %s896, 16
        %s898 = scalar_lea.vmem [#allocation6], %s897
        // Predicated region
        $region77: #{gmlp_block.1} parent=71 // pred_check
          %p899 = pneg %p324
        $region78: #{gmlp_block.1} parent=71 // pred_check_branch
          %901 = sbr.rel (%p899) target = $region80
        $region79: #{gmlp_block.1} parent=71 // pred_region
          %s902 = smul.u32 2, %s28
          %s904 = ssub.s32 256, 256
          %905 = vsyncadd %s895, %s904
          %s906 = smul.addr %s902, 128
          %s907 = scalar_lea.hbm %s13, %s906
          %s908 = sshll.u32 %s898, 4
          %s909 = int_to_ptr.vmem [resolvable:$true] %s908
          %914 = dma.vmem_to_hbm [thread:$0]  %s909, 256, %s907, %s895, 128, 128, 8
        $region80: #{gmlp_block.1} parent=71 // pred_fallthru
          _
      $region72: #{gmlp_block.1} parent=5 // pred_fallthru
        _
      %p915 = scmp.le.s32.totalorder 2, %s23
      // Predicated region
      $region81: #{gmlp_block.1} parent=5 // pred_check
        %p916 = pneg %p915
      $region82: #{gmlp_block.1} parent=5 // pred_check_branch
        %918 = sbr.rel (%p916) target = $region84
      $region83: #{gmlp_block.1} parent=5 // pred_region
        %s919 = ssub.s32 %s23, 2
        // Predicated region
        $region85: #{gmlp_block.1} parent=83 // pred_check
          %p920 = pneg %p330
        $region86: #{gmlp_block.1} parent=83 // pred_check_branch
          %922 = sbr.rel (%p920) target = $region88
        $region87: #{gmlp_block.1} parent=83 // pred_region
          %s923 = sand.u32 %s315, 1
          %s924 = scalar_lea.sflag [#allocation5], %s923
          %s925 = sand.u32 %s315, 1
          %s926 = smul.addr %s925, 16
          %s927 = scalar_lea.vmem [#allocation6], %s926
          %928 = dma.done %s924, 256
        $region88: #{gmlp_block.1} parent=83 // pred_fallthru
          _
      $region84: #{gmlp_block.1} parent=5 // pred_fallthru
        _
    $region6: #{gmlp_block.1} parent=1 // loop_footer
      %s27 = sadd.s32 1, %s23
    $region7: #{gmlp_block.1} parent=1 // loop_footer_branch
      %22 = sbr.rel target = $region3
    $region8: #{gmlp_block.1} parent=1 // loop_exit
      _
    %929 = vsyncpa [#allocation4], 1
    %s930 = scalar_lea.sflag [#allocation4], 1
    %931 = vsyncpa %s930, 1
    %932 = vsyncpa [#allocation5], 1
    %s933 = scalar_lea.sflag [#allocation5], 1
    %934 = vsyncpa %s933, 1

</llo_original>
